<compile_context>
chip_gen: v7x
topology: tpu7x:2x2x1
jax: 0.10.0
libtpu: 0.0.40
codegen_flags: <defaults>
</compile_context>

<pallas_src>
import jax
import jax.numpy as jnp
from jax.experimental import pallas as pl
from jax.experimental.pallas import tpu as pltpu


def _round_up(x, m):
    return ((x + m - 1) // m) * m


def _deconv_matmul_kernel(x_ref, w_ref, b_ref, o_ref):
    # x_ref: (tm, K), w_ref: (K, tn), b_ref: (1, tn), o_ref: (tm, tn)
    acc = jnp.dot(x_ref[...], w_ref[...], preferred_element_type=jnp.float32)
    o_ref[...] = (acc + b_ref[...]).astype(o_ref.dtype)


def segmentation_head_forward(x, weight, bias, patch_size, *,
                              tm=256, tn=256, compute_dtype=None):
    """ConvTranspose2d(embed_dim, out_ch, kernel_size=p, stride=p) forward.

    x:      (B, C_in, H, W)      -- NCHW, matching the PyTorch module
    weight: (C_in, C_out, p, p)  -- PyTorch ConvTranspose2d weight layout
    bias:   (C_out,)
    returns (B, C_out, H*p, W*p) in x.dtype
    """
    B, C_in, H, W = x.shape
    _, C_out, p, _ = weight.shape
    assert p == patch_size

    M = B * H * W
    K = C_in
    N = C_out * p * p

    out_dtype = x.dtype
    if compute_dtype is None:
        compute_dtype = x.dtype
    compute_dtype = jnp.dtype(compute_dtype)

    # Tile sizes: sublane granularity 16 covers both f32 (8) and bf16 (16);
    # lane dim (tn) must be a multiple of 128.  Clamp tiles to the (padded)
    # problem size so tiny demo shapes don't allocate huge blocks.
    sub = 16 if compute_dtype == jnp.bfloat16 else 8
    tm_eff = _round_up(min(tm, _round_up(M, sub)), sub)
    tn_eff = _round_up(min(tn, _round_up(N, 128)), 128)

    M_pad = _round_up(M, tm_eff)
    N_pad = _round_up(N, tn_eff)

    # (B, C_in, H, W) -> (B, H, W, C_in) -> (M, K)
    x_flat = jnp.transpose(x, (0, 2, 3, 1)).reshape(M, K).astype(compute_dtype)
    # (C_in, C_out, p, p) -> (K, N) with N flattened as (co, kh, kw)
    w_mat = weight.reshape(K, N).astype(compute_dtype)
    # bias broadcast over (kh, kw) positions of each output channel; kept f32.
    bias_full = jnp.repeat(bias, p * p).reshape(1, N).astype(jnp.float32)

    if M_pad != M:
        x_flat = jnp.pad(x_flat, ((0, M_pad - M), (0, 0)))
    if N_pad != N:
        w_mat = jnp.pad(w_mat, ((0, 0), (0, N_pad - N)))
        bias_full = jnp.pad(bias_full, ((0, 0), (0, N_pad - N)))

    grid = (M_pad // tm_eff, N_pad // tn_eff)

    # VMEM budget: double-buffered x, w, bias tiles + out tile, plus headroom.
    in_item = compute_dtype.itemsize
    out_item = jnp.dtype(out_dtype).itemsize
    tile_bytes = (tm_eff * K * in_item          # x tile
                  + K * tn_eff * in_item        # w tile
                  + tn_eff * 4                  # bias tile (f32)
                  + tm_eff * tn_eff * out_item) # out tile
    vmem_limit = int(max(2 * tile_bytes + (4 << 20), 32 << 20))

    cost = pl.CostEstimate(
        flops=2 * M_pad * K * N_pad,
        transcendentals=0,
        bytes_accessed=(M_pad * K * in_item
                        + grid[0] * K * N_pad * in_item   # w re-read per M tile
                        + M_pad * N_pad * out_item),
    )

    out_flat = pl.pallas_call(
        _deconv_matmul_kernel,
        out_shape=jax.ShapeDtypeStruct((M_pad, N_pad), out_dtype),
        grid_spec=pltpu.PrefetchScalarGridSpec(
            num_scalar_prefetch=0,
            grid=grid,
            in_specs=[
                pl.BlockSpec((tm_eff, K), lambda i, j: (i, 0)),
                pl.BlockSpec((K, tn_eff), lambda i, j: (0, j)),
                pl.BlockSpec((1, tn_eff), lambda i, j: (0, j)),
            ],
            out_specs=pl.BlockSpec((tm_eff, tn_eff), lambda i, j: (i, j)),
        ),
        compiler_params=pltpu.CompilerParams(
            dimension_semantics=("parallel", "parallel"),
            vmem_limit_bytes=vmem_limit,
        ),
        cost_estimate=cost,
    )(x_flat, w_mat, bias_full)

    out_flat = out_flat[:M, :N]

    # (M, N) -> (B, H, W, C_out, p, p) -> (B, C_out, H, p, W, p) -> NCHW
    y = out_flat.reshape(B, H, W, C_out, p, p)
    y = jnp.transpose(y, (0, 3, 1, 4, 2, 5)).reshape(B, C_out, H * p, W * p)
    return y.astype(x.dtype)


def _reference_forward(x, weight, bias):
    # Pure-JAX reference of ConvTranspose2d with kernel_size == stride.
    B, C_in, H, W = x.shape
    _, C_out, p, _ = weight.shape
    y = jnp.einsum("bchw,cokl->bohkwl", x, weight)  # (B, C_out, H, p, W, p)
    y = y.reshape(B, C_out, H * p, W * p)
    return y + bias[None, :, None, None]


if __name__ == "__main__":
    # Small, forward-consistent shapes:
    #   embed_dim = 32, output_shape = (3, 8) => out channels 3, patch_size 8
    #   x: (B=2, embed_dim=32, H=4, W=4)
    B, embed_dim, H, W = 2, 32, 4, 4
    out_ch, patch_size = 3, 8

    key = jax.random.PRNGKey(0)
    kx, kw, kb = jax.random.split(key, 3)

    x = jax.random.normal(kx, (B, embed_dim, H, W), dtype=jnp.float32)

    # Deterministic parameter init (ConvTranspose2d-like uniform scale).
    fan_in = embed_dim * patch_size * patch_size
    bound = 1.0 / (fan_in ** 0.5)
    weight = jax.random.uniform(
        kw, (embed_dim, out_ch, patch_size, patch_size),
        minval=-bound, maxval=bound, dtype=jnp.float32)
    bias = jax.random.uniform(
        kb, (out_ch,), minval=-bound, maxval=bound, dtype=jnp.float32)

    y_ref = _reference_forward(x, weight, bias)

    # f32 compute path (tight tolerance).
    y = segmentation_head_forward(x, weight, bias, patch_size)
    y = jax.block_until_ready(y)
    assert y.shape == (B, out_ch, H * patch_size, W * patch_size)
    assert jnp.allclose(y, y_ref, atol=1e-5, rtol=1e-5)

    # bf16 compute path (halves HBM traffic on v6e/v7x); f32 MXU accumulation.
    y_bf16 = segmentation_head_forward(
        x, weight, bias, patch_size, compute_dtype=jnp.bfloat16)
    y_bf16 = jax.block_until_ready(y_bf16)
    assert jnp.allclose(y_bf16, y_ref, atol=5e-2, rtol=5e-2)

    print("KERNEL_OK")
</pallas_src>

<mosaic_0001>
module attributes {stable_mosaic.version = 11 : i64} {
  func.func @_deconv_matmul_kernel(%arg0: i32, %arg1: i32, %arg2: memref<32x32xf32, #tpu.memory_space<vmem>>, %arg3: memref<32x256xf32, #tpu.memory_space<vmem>>, %arg4: memref<1x256xf32, #tpu.memory_space<vmem>>, %arg5: memref<32x256xf32, #tpu.memory_space<vmem>>) attributes {dimension_semantics = [#tpu.dimension_semantics<parallel>, #tpu.dimension_semantics<parallel>], iteration_bounds = array<i64: 1, 1>, scalar_prefetch = 0 : i64, scratch_operands = 0 : i64, tpu.core_type = #tpu.core_type<tc>, window_params = [{transform_indices = @transform_0, window_bounds = array<i64: 32, 32>}, {transform_indices = @transform_1, window_bounds = array<i64: 32, 256>}, {transform_indices = @transform_2, window_bounds = array<i64: 1, 256>}, {transform_indices = @transform_3, window_bounds = array<i64: 32, 256>}]} {
    %c0 = arith.constant 0 : index
    %c0_0 = arith.constant 0 : index
    %0 = vector.load %arg2[%c0, %c0_0] : memref<32x32xf32, #tpu.memory_space<vmem>>, vector<32x32xf32>
    %c0_1 = arith.constant 0 : index
    %c0_2 = arith.constant 0 : index
    %1 = vector.load %arg3[%c0_1, %c0_2] : memref<32x256xf32, #tpu.memory_space<vmem>>, vector<32x256xf32>
    %cst = arith.constant dense<0.000000e+00> : vector<32x256xf32>
    %2 = tpu.matmul %0, %1, %cst {dimension_numbers = #tpu.dot_dimension_numbers<[1], [0], [0], [1], [0, 0, 1, 1], [], []>} : vector<32x32xf32>, vector<32x256xf32>, vector<32x256xf32> -> vector<32x256xf32>
    %c0_3 = arith.constant 0 : index
    %c0_4 = arith.constant 0 : index
    %3 = vector.load %arg4[%c0_3, %c0_4] : memref<1x256xf32, #tpu.memory_space<vmem>>, vector<1x256xf32>
    %4 = vector.broadcast %3 : vector<1x256xf32> to vector<32x256xf32>
    %5 = arith.addf %2, %4 : vector<32x256xf32>
    %c0_5 = arith.constant 0 : index
    %c0_6 = arith.constant 0 : index
    %6 = vector.load %arg5[%c0_5, %c0_6] : memref<32x256xf32, #tpu.memory_space<vmem>>, vector<32x256xf32>
    tpu.vector_store %arg5[%c0_5, %c0_6], %5 {strides = array<i32>} : memref<32x256xf32, #tpu.memory_space<vmem>>, vector<32x256xf32>,
    return
  }
  func.func @transform_0(%arg0: i32, %arg1: i32) -> (i32, i32) {
    %c0_i32 = arith.constant 0 : i32
    %c0_i32_0 = arith.constant 0 : i32
    return %arg0, %c0_i32 : i32, i32
  }
  func.func @transform_1(%arg0: i32, %arg1: i32) -> (i32, i32) {
    %c0_i32 = arith.constant 0 : i32
    %c0_i32_0 = arith.constant 0 : i32
    return %c0_i32, %arg1 : i32, i32
  }
  func.func @transform_2(%arg0: i32, %arg1: i32) -> (i32, i32) {
    %c0_i32 = arith.constant 0 : i32
    %c0_i32_0 = arith.constant 0 : i32
    return %c0_i32, %arg1 : i32, i32
  }
  func.func @transform_3(%arg0: i32, %arg1: i32) -> (i32, i32) {
    %c0_i32 = arith.constant 0 : i32
    return %arg0, %arg1 : i32, i32
  }
}

</mosaic_0001>

<llo_original>
// kernel: tpu_custom_call.1
$region0: #{tpu_custom_call.1}
  #allocation0 [shape = 'u32[]', space=smem, size = 0x4, offset = 0x4, fixed_abs, tag = 'smem constant byte address 0x4 - core index']
  #allocation1 [shape = 'u32[144,128]{1,0:T(1,128)}', space=vmem, size = 0x12000, scoped, tag = 'internal scratch']
  %s0 = inlined_call_operand.hbm [shape: f32[32,32], index: 0, kind: input, shape index: {}]
  %s1 = inlined_call_operand.hbm [shape: f32[32,256], index: 1, kind: input, shape index: {}]
  %s2 = inlined_call_operand.vmem [shape: f32[1,256], index: 2, kind: input, shape index: {}]
  %s3 = inlined_call_operand.hbm [shape: f32[32,256], index: 3, kind: output, shape index: {}]
  %s4 = sld [smem:[#allocation0]]
  $region30: #{tpu_custom_call.1} parent=0
    _
  %s6 = ssub.s32 1, %s4
  %s7 = scalar_select 0, %s6, %s4
  $region1: #{tpu_custom_call.1} parent=0
    #allocation2 [shape = 'u8[16384]{0}', space=vmem, size = 0x4000, scoped, tag = 'input window, operand 0, single buffered']
    #allocation3 [shape = 's32[1]{0}', space=sflag, size = 0x4, scoped, tag = 'scoped memory for tpu_custom_call.1']
    #allocation4 [shape = 's32[1]{0}', space=sflag, size = 0x4, scoped, tag = 'scoped memory for tpu_custom_call.1']
    #allocation5 [shape = 'u8[32768]{0}', space=vmem, size = 0x8000, scoped, tag = 'input window, operand 1, single buffered']
    #allocation6 [shape = 's32[1]{0}', space=sflag, size = 0x4, scoped, tag = 'scoped memory for tpu_custom_call.1']
    #allocation7 [shape = 'u8[32768]{0}', space=vmem, size = 0x8000, scoped, tag = 'output window, operand 0, single buffered']
    %8 = vsyncpa [#allocation3], 0
    %9 = vsyncpa [#allocation6], 0
    %10 = vsyncpa [#allocation4], 0
    // Predicated region
    $region2: #{tpu_custom_call.1} parent=1 // pred_check
      _
    $region3: #{tpu_custom_call.1} parent=1 // pred_check_branch
      %12 = sbr.rel (0) target = $region5
    $region4: #{tpu_custom_call.1} parent=1 // pred_region
      %s14 = ssub.s32 512, 512
      %15 = vsyncadd [#allocation3], %s14
      %s16 = sshll.u32 [#allocation2], 4
      %s17 = int_to_ptr.vmem [resolvable:$true] %s16
      %22 = dma.hbm_to_vmem [thread:$0]  %s0, 512, %s17, [#allocation3], 128, 128, 8
    $region5: #{tpu_custom_call.1} parent=1 // pred_fallthru
      _
    // Predicated region
    $region6: #{tpu_custom_call.1} parent=1 // pred_check
      _
    $region7: #{tpu_custom_call.1} parent=1 // pred_check_branch
      %24 = sbr.rel (0) target = $region9
    $region8: #{tpu_custom_call.1} parent=1 // pred_region
      %s26 = ssub.s32 1024, 1024
      %27 = vsyncadd [#allocation6], %s26
      %s28 = sshll.u32 [#allocation5], 4
      %s29 = int_to_ptr.vmem [resolvable:$true] %s28
      %34 = dma.hbm_to_vmem [thread:$0]  %s1, 1024, %s29, [#allocation6], 256, 256, 16
    $region9: #{tpu_custom_call.1} parent=1 // pred_fallthru
      _
    // Predicated region
    $region10: #{tpu_custom_call.1} parent=1 // pred_check
      _
    $region11: #{tpu_custom_call.1} parent=1 // pred_check_branch
      %36 = sbr.rel (0) target = $region13
    $region12: #{tpu_custom_call.1} parent=1 // pred_region
      _
    $region13: #{tpu_custom_call.1} parent=1 // pred_fallthru
      _
    // Predicated region
    $region14: #{tpu_custom_call.1} parent=1 // pred_check
      _
    $region15: #{tpu_custom_call.1} parent=1 // pred_check_branch
      %38 = sbr.rel (0) target = $region17
    $region16: #{tpu_custom_call.1} parent=1 // pred_region
      %39 = dma.done [#allocation3], 512
    $region17: #{tpu_custom_call.1} parent=1 // pred_fallthru
      _
    // Predicated region
    $region18: #{tpu_custom_call.1} parent=1 // pred_check
      _
    $region19: #{tpu_custom_call.1} parent=1 // pred_check_branch
      %41 = sbr.rel (0) target = $region21
    $region20: #{tpu_custom_call.1} parent=1 // pred_region
      %42 = dma.done [#allocation6], 1024
    $region21: #{tpu_custom_call.1} parent=1 // pred_fallthru
      _
    %v43 = vld [vmem:[#allocation2] sm:$0xff]
    %v44 = vld [vmem:[#allocation2 + $0x8] sm:$0xff]
    %v45 = vld [vmem:[#allocation2 + $0x10] sm:$0xff]
    %v46 = vld [vmem:[#allocation2 + $0x18] sm:$0xff]
    %v47 = vld [vmem:[#allocation5] sm:$0xff]
    %v48 = vld [vmem:[#allocation5 + $0x8] sm:$0xff]
    %v49 = vld [vmem:[#allocation5 + $0x10] sm:$0xff]
    %v50 = vld [vmem:[#allocation5 + $0x18] sm:$0xff]
    %v51 = vld [vmem:[#allocation5 + $0x20] sm:$0xff]
    %v52 = vld [vmem:[#allocation5 + $0x28] sm:$0xff]
    %v53 = vld [vmem:[#allocation5 + $0x30] sm:$0xff]
    %v54 = vld [vmem:[#allocation5 + $0x38] sm:$0xff]
    %v55 = vld [vmem:[%s2] sm:$0x3]
    %v57 = vlaneseq
    %v58 = vshrl.u32 %v57, 7
    %v59 = vsub.s32 0, %v58
    %v60 = vrot.slane %v55, %v59
    %v61 = vlaneseq
    %v62 = vshrl.u32 %v61, 7
    %v63 = vsub.s32 1, %v62
    %v64 = vrot.slane %v55, %v63
    %vm67 = vcmask 261120
    %v69 = vsel %vm67, %v43, 0
    %v72 = vsel %vm67, %v44, 0
    %v75 = vsel %vm67, %v45, 0
    %v78 = vsel %vm67, %v46, 0
    %80 = vmatprep.subr.mxu0 %v48
    %81 = vmatpush1.msra.mxu0 %v47
    %82 = vmatprep.subr.mxu0 %v50
    %83 = vmatpush1.msra.mxu0 %v49
    %84 = vmatprep.subr.mxu0 %v52
    %85 = vmatpush1.msra.mxu0 %v51
    %86 = vmatprep.subr.mxu0 %v54
    %87 = vmatpush1.msra.mxu0 %v53
    %88 = vmatprep.subr.mxu0 0.0
    %89 = vmatpush1.msra.mxu0 0.0
    %90 = vmatprep.subr.mxu0 0.0
    %91 = vmatpush1.msra.mxu0 0.0
    %92 = vmatprep.subr.mxu0 0.0
    %93 = vmatpush1.msra.mxu0 0.0
    %94 = vmatprep.subr.mxu0 0.0
    %95 = vmatpush1.msra.mxu0 0.0
    %96 = vmatprep.subr.mxu0 0.0
    %97 = vmatpush1.msra.mxu0 0.0
    %98 = vmatprep.subr.mxu0 0.0
    %99 = vmatpush1.msra.mxu0 0.0
    %100 = vmatprep.subr.mxu0 0.0
    %101 = vmatpush1.msra.mxu0 0.0
    %102 = vmatprep.subr.mxu0 0.0
    %103 = vmatpush1.msra.mxu0 0.0
    %104 = vmatprep.subr.mxu0 0.0
    %105 = vmatpush1.msra.mxu0 0.0
    %106 = vmatprep.subr.mxu0 0.0
    %107 = vmatpush1.msra.mxu0 0.0
    %108 = vmatprep.subr.mxu0 0.0
    %109 = vmatpush1.msra.mxu0 0.0
    %110 = vmatprep.subr.mxu0 0.0
    %111 = vmatpush1.msra.mxu0 0.0
    %112 = vmatprep.subr.mxu0 0.0
    %113 = vmatpush1.msra.mxu0 0.0
    %114 = vmatprep.subr.mxu0 0.0
    %115 = vmatpush1.msra.mxu0 0.0
    %116 = vmatprep.subr.mxu0 0.0
    %117 = vmatpush1.msra.mxu0 0.0
    %118 = vmatprep.subr.mxu0 0.0
    %119 = vmatpush1.msra.mxu0 0.0
    %120 = vmatprep.subr.mxu0 0.0
    %121 = vmatpush1.msra.mxu0 0.0
    %122 = vmatprep.subr.mxu0 0.0
    %123 = vmatpush1.msra.mxu0 0.0
    %124 = vmatprep.subr.mxu0 0.0
    %125 = vmatpush1.msra.mxu0 0.0
    %126 = vmatprep.subr.mxu0 0.0
    %127 = vmatpush1.msra.mxu0 0.0
    %128 = vmatprep.subr.mxu0 0.0
    %129 = vmatpush1.msra.mxu0 0.0
    %130 = vmatprep.subr.mxu0 0.0
    %131 = vmatpush1.msra.mxu0 0.0
    %132 = vmatprep.subr.mxu0 0.0
    %133 = vmatpush1.msra.mxu0 0.0
    %134 = vmatprep.subr.mxu0 0.0
    %135 = vmatpush1.msra.mxu0 0.0
    %136 = vmatprep.subr.mxu0 0.0
    %137 = vmatpush1.msra.mxu0 0.0
    %138 = vmatprep.subr.mxu0 0.0
    %139 = vmatpush1.msra.mxu0 0.0
    %140 = vmatprep.subr.mxu0 0.0
    %141 = vmatpush1.msra.mxu0 0.0
    %142 = vmatprep.subr.mxu0 0.0
    %143 = vmatpush1.msra.mxu0 0.0
    %144 = vmatprep.mubr.f32.mxu0 0.0
    %145 = vmatmul.mubr.f32.gmra.mrb[0].mxu0 %v69
    %v146 = vpop.f32.mrb[0].mxu0
    %v147 = vadd.f32 %v60, %v146
    %v148 = vpop.f32.mrb[0].mxu0
    %v149 = vadd.f32 %v64, %v148
    %150 = vmatprep.mubr.f32.mxu0 0.0
    %151 = vmatmul.mubr.f32.gmra.mrb[0].mxu0 %v72
    %v152 = vpop.f32.mrb[0].mxu0
    %v153 = vadd.f32 %v60, %v152
    %v154 = vpop.f32.mrb[0].mxu0
    %v155 = vadd.f32 %v64, %v154
    %156 = vmatprep.mubr.f32.mxu0 0.0
    %157 = vmatmul.mubr.f32.gmra.mrb[0].mxu0 %v75
    %v158 = vpop.f32.mrb[0].mxu0
    %v159 = vadd.f32 %v60, %v158
    %v160 = vpop.f32.mrb[0].mxu0
    %v161 = vadd.f32 %v64, %v160
    %162 = vmatprep.mubr.f32.mxu0 0.0
    %163 = vmatmul.mubr.f32.gmra.mrb[0].mxu0 %v78
    %v164 = vpop.f32.mrb[0].mxu0
    %v165 = vadd.f32 %v60, %v164
    %v166 = vpop.f32.mrb[0].mxu0
    %v167 = vadd.f32 %v64, %v166
    %168 = vdwg.mxu0
    %169 = vst [vmem:[#allocation7] sm:$0xff] %v147
    %170 = vst [vmem:[#allocation7 + $0x8] sm:$0xff] %v149
    %171 = vst [vmem:[#allocation7 + $0x10] sm:$0xff] %v153
    %172 = vst [vmem:[#allocation7 + $0x18] sm:$0xff] %v155
    %173 = vst [vmem:[#allocation7 + $0x20] sm:$0xff] %v159
    %174 = vst [vmem:[#allocation7 + $0x28] sm:$0xff] %v161
    %175 = vst [vmem:[#allocation7 + $0x30] sm:$0xff] %v165
    %176 = vst [vmem:[#allocation7 + $0x38] sm:$0xff] %v167
    // Predicated region
    $region22: #{tpu_custom_call.1} parent=1 // pred_check
      _
    $region23: #{tpu_custom_call.1} parent=1 // pred_check_branch
      %178 = sbr.rel (0) target = $region25
    $region24: #{tpu_custom_call.1} parent=1 // pred_region
      %s180 = ssub.s32 1024, 1024
      %181 = vsyncadd [#allocation4], %s180
      %s182 = sshll.u32 [#allocation7], 4
      %s183 = int_to_ptr.vmem [resolvable:$true] %s182
      %188 = dma.vmem_to_hbm [thread:$0]  %s183, 1024, %s3, [#allocation4], 256, 256, 16
    $region25: #{tpu_custom_call.1} parent=1 // pred_fallthru
      _
    // Predicated region
    $region26: #{tpu_custom_call.1} parent=1 // pred_check
      _
    $region27: #{tpu_custom_call.1} parent=1 // pred_check_branch
      %190 = sbr.rel (0) target = $region29
    $region28: #{tpu_custom_call.1} parent=1 // pred_region
      %191 = dma.done [#allocation4], 1024
    $region29: #{tpu_custom_call.1} parent=1 // pred_fallthru
      _
    %192 = vsyncpa [#allocation3], 1
    %193 = vsyncpa [#allocation6], 1
    %194 = vsyncpa [#allocation4], 1

</llo_original>
